<compile_context>
chip_gen: v5e
topology: v5e:2x2
jax: 0.10.0
libtpu: 0.0.40
codegen_flags: <defaults>
</compile_context>

<pallas_src>
import functools

import jax
import jax.numpy as jnp
from jax.experimental import pallas as pl
from jax.experimental.pallas import tpu as pltpu


def _round_up(x, m):
    return (x + m - 1) // m * m


# ---------------------------------------------------------------------------
# Kernel
# ---------------------------------------------------------------------------
def _disagreement_kernel(obs_ref, act_ref, nxt_ref, w1o_ref, w1a_ref, b1_ref,
                         w2_ref, b2_ref, out_ref, *, n_models, hidden_p):
    # Fused ensemble layer 1: one wide MXU pass for all members, f32 accumulate.
    h = jnp.dot(obs_ref[...], w1o_ref[...], preferred_element_type=jnp.float32)
    h = h + jnp.dot(act_ref[...], w1a_ref[...], preferred_element_type=jnp.float32)
    h = jnp.maximum(h + b1_ref[...], 0.0)          # (TB, n_models*hidden_p) f32

    nxt = nxt_ref[...].astype(jnp.float32)         # (TB, obs_dim) f32
    w2_dtype = w2_ref.dtype

    sq_errs = []
    for m in range(n_models):                      # static unroll (n_models small)
        # 128-aligned lane slice of the fused hidden activation (free view).
        h_m = h[:, m * hidden_p:(m + 1) * hidden_p]
        pred = jnp.dot(h_m.astype(w2_dtype), w2_ref[m],
                       preferred_element_type=jnp.float32)
        pred = pred + b2_ref[m:m + 1, :]
        diff = nxt - pred
        sq_errs.append(jnp.sum(diff * diff, axis=-1))   # (TB,) lane-dense row

    # (n_models, TB) lane-dense block: one sqrt stream, one unmasked store.
    out_ref[...] = jnp.sqrt(jnp.stack(sq_errs, axis=0))


# ---------------------------------------------------------------------------
# One-time parameter repacking (done once, kept in HBM, reused every call)
# ---------------------------------------------------------------------------
def prepare_params(params, obs_dim, matmul_dtype=jnp.float32):
    """Pad hidden to a multiple of 128 and fuse layer-1 weights across models.

    Padded hidden units are exact no-ops: zero W1 columns + zero b1 -> ReLU(0)=0,
    and the matching zero W2 rows contribute nothing to the prediction.
    """
    w1, b1, w2, b2 = params        # (M,in,H), (M,H), (M,H,obs), (M,obs)
    n_models, in_dim, hidden = w1.shape
    hidden_p = _round_up(hidden, 128)
    pad_h = hidden_p - hidden

    w1p = jnp.pad(w1, ((0, 0), (0, 0), (0, pad_h)))
    b1p = jnp.pad(b1, ((0, 0), (0, pad_h)))
    w2p = jnp.pad(w2, ((0, 0), (0, pad_h), (0, 0)))

    # (in_dim, n_models*hidden_p): per-model 128-aligned column blocks.
    w1cat = jnp.transpose(w1p, (1, 0, 2)).reshape(in_dim, n_models * hidden_p)

    return dict(
        w1o=w1cat[:obs_dim].astype(matmul_dtype),    # obs rows of fused W1
        w1a=w1cat[obs_dim:].astype(matmul_dtype),    # action rows of fused W1
        b1=b1p.reshape(1, n_models * hidden_p).astype(jnp.float32),
        w2=w2p.astype(matmul_dtype),
        b2=b2.astype(jnp.float32),
        n_models=n_models,
        hidden_p=hidden_p,
        obs_dim=obs_dim,
        action_dim=in_dim - obs_dim,
        matmul_dtype=matmul_dtype,
    )


# ---------------------------------------------------------------------------
# Forward wrapper
# ---------------------------------------------------------------------------
def disagreement_forward(obs, action, next_obs, prepped, *, tb_max=512):
    """Pallas-backed equivalent of Disagreement.forward -> (B, n_models)."""
    assert obs.shape[0] == next_obs.shape[0]
    assert obs.shape[0] == action.shape[0]

    n_models = prepped["n_models"]
    hidden_p = prepped["hidden_p"]
    obs_dim = prepped["obs_dim"]
    action_dim = prepped["action_dim"]
    mm_dtype = prepped["matmul_dtype"]
    ncat = n_models * hidden_p

    B = obs.shape[0]
    # Batch tile: one full-width block for small B, else 512-row blocks
    # (multiple of 128 lanes for the (n_models, TB) output; >=512 rows
    # amortizes the ~0.35 us per-grid-step overhead).  VMEM footprint here is
    # tiny, well under v7x's 64 MiB; vmem_limit set explicitly with headroom.
    if B <= tb_max:
        TB = _round_up(B, 8)
    else:
        TB = tb_max                     # multiple of 128 for multi-block grids
    B_p = _round_up(B, TB)

    def pad_rows(a):
        return a if B_p == B else jnp.pad(a, ((0, B_p - B), (0, 0)))

    obs_p = pad_rows(obs.astype(mm_dtype))
    act_p = pad_rows(action.astype(mm_dtype))
    nxt_p = pad_rows(next_obs.astype(jnp.float32))

    kernel = functools.partial(_disagreement_kernel,
                               n_models=n_models, hidden_p=hidden_p)

    out = pl.pallas_call(
        kernel,
        out_shape=jax.ShapeDtypeStruct((n_models, B_p), jnp.float32),
        grid=(B_p // TB,),
        in_specs=[
            pl.BlockSpec((TB, obs_dim), lambda i: (i, 0)),          # obs
            pl.BlockSpec((TB, action_dim), lambda i: (i, 0)),       # action
            pl.BlockSpec((TB, obs_dim), lambda i: (i, 0)),          # next_obs
            pl.BlockSpec((obs_dim, ncat), lambda i: (0, 0)),        # W1 (obs rows)
            pl.BlockSpec((action_dim, ncat), lambda i: (0, 0)),     # W1 (act rows)
            pl.BlockSpec((1, ncat), lambda i: (0, 0)),              # b1 (fused)
            pl.BlockSpec((n_models, hidden_p, obs_dim), lambda i: (0, 0, 0)),  # W2
            pl.BlockSpec((n_models, obs_dim), lambda i: (0, 0)),    # b2
        ],
        out_specs=pl.BlockSpec((n_models, TB), lambda i: (0, i)),
        compiler_params=pltpu.CompilerParams(
            dimension_semantics=("parallel",),
            vmem_limit_bytes=48 * 1024 * 1024),
    )(obs_p, act_p, nxt_p,
      prepped["w1o"], prepped["w1a"], prepped["b1"],
      prepped["w2"], prepped["b2"])

    # Lane-dense (n_models, B) kernel output -> module's (B, n_models) contract.
    return out[:, :B].T


# ---------------------------------------------------------------------------
# Init + pure-JAX reference
# ---------------------------------------------------------------------------
def init_params(key, obs_dim, action_dim, hidden_dim, n_models):
    """Deterministic PyTorch-Linear-style (uniform +-1/sqrt(fan_in)) init."""
    in_dim = obs_dim + action_dim
    k1, k2, k3, k4 = jax.random.split(key, 4)
    bound1 = 1.0 / jnp.sqrt(in_dim)
    bound2 = 1.0 / jnp.sqrt(hidden_dim)
    w1 = jax.random.uniform(k1, (n_models, in_dim, hidden_dim), jnp.float32,
                            -bound1, bound1)
    b1 = jax.random.uniform(k2, (n_models, hidden_dim), jnp.float32,
                            -bound1, bound1)
    w2 = jax.random.uniform(k3, (n_models, hidden_dim, obs_dim), jnp.float32,
                            -bound2, bound2)
    b2 = jax.random.uniform(k4, (n_models, obs_dim), jnp.float32,
                            -bound2, bound2)
    return w1, b1, w2, b2


def reference_forward(obs, action, next_obs, params):
    w1, b1, w2, b2 = params
    x = jnp.concatenate([obs, action], axis=-1)
    cols = []
    for m in range(w1.shape[0]):
        h = jnp.maximum(x @ w1[m] + b1[m], 0.0)
        pred = h @ w2[m] + b2[m]
        cols.append(jnp.linalg.norm(next_obs - pred, axis=-1, keepdims=True))
    return jnp.concatenate(cols, axis=1)


if __name__ == "__main__":
    B, obs_dim, action_dim, hidden_dim, n_models = 8, 16, 8, 32, 5

    key = jax.random.PRNGKey(0)
    k_obs, k_act, k_next, k_params = jax.random.split(key, 4)
    obs = jax.random.normal(k_obs, (B, obs_dim), jnp.float32)
    action = jax.random.normal(k_act, (B, action_dim), jnp.float32)
    next_obs = jax.random.normal(k_next, (B, obs_dim), jnp.float32)
    params = init_params(k_params, obs_dim, action_dim, hidden_dim, n_models)
    ref = reference_forward(obs, action, next_obs, params)

    # --- f32 path, single-block grid ---------------------------------------
    prepped = prepare_params(params, obs_dim, matmul_dtype=jnp.float32)
    out = jax.block_until_ready(disagreement_forward(obs, action, next_obs, prepped))
    assert out.shape == (B, n_models)
    assert jnp.allclose(out, ref, atol=1e-4, rtol=1e-4), "f32 mismatch"

    # --- f32 path, multi-block batch-tiled grid (exercises padding/pipeline) -
    B2 = 640
    kb = jax.random.split(jax.random.PRNGKey(1), 3)
    obs2 = jax.random.normal(kb[0], (B2, obs_dim), jnp.float32)
    act2 = jax.random.normal(kb[1], (B2, action_dim), jnp.float32)
    nxt2 = jax.random.normal(kb[2], (B2, obs_dim), jnp.float32)
    out2 = jax.block_until_ready(disagreement_forward(obs2, act2, nxt2, prepped))
    ref2 = reference_forward(obs2, act2, nxt2, params)
    assert out2.shape == (B2, n_models)
    assert jnp.allclose(out2, ref2, atol=1e-4, rtol=1e-4), "tiled f32 mismatch"

    # --- bf16 matmul-input path (v6e/v7x fast path; f32 accumulate) ---------
    prepped_bf16 = prepare_params(params, obs_dim, matmul_dtype=jnp.bfloat16)
    out_bf16 = jax.block_until_ready(
        disagreement_forward(obs, action, next_obs, prepped_bf16))
    assert jnp.allclose(out_bf16, ref, atol=1e-1, rtol=1e-1), "bf16 mismatch"

    print("KERNEL_OK")
</pallas_src>

<mosaic_0001>
module attributes {stable_mosaic.version = 11 : i64} {
  func.func @_disagreement_kernel(%arg0: i32, %arg1: memref<8x16xf32, #tpu.memory_space<vmem>>, %arg2: memref<8x8xf32, #tpu.memory_space<vmem>>, %arg3: memref<8x16xf32, #tpu.memory_space<vmem>>, %arg4: memref<16x640xf32, #tpu.memory_space<vmem>>, %arg5: memref<8x640xf32, #tpu.memory_space<vmem>>, %arg6: memref<1x640xf32, #tpu.memory_space<vmem>>, %arg7: memref<5x128x16xf32, #tpu.memory_space<vmem>>, %arg8: memref<5x16xf32, #tpu.memory_space<vmem>>, %arg9: memref<5x8xf32, #tpu.memory_space<vmem>>) attributes {dimension_semantics = [#tpu.dimension_semantics<parallel>], iteration_bounds = array<i64: 1>, scalar_prefetch = 0 : i64, scratch_operands = 0 : i64, tpu.core_type = #tpu.core_type<tc>, window_params = [{transform_indices = @transform_0, window_bounds = array<i64: 8, 16>}, {transform_indices = @transform_1, window_bounds = array<i64: 8, 8>}, {transform_indices = @transform_2, window_bounds = array<i64: 8, 16>}, {pipeline_mode = #tpu.pipeline_mode<synchronous>, transform_indices = @transform_3, window_bounds = array<i64: 16, 640>}, {pipeline_mode = #tpu.pipeline_mode<synchronous>, transform_indices = @transform_4, window_bounds = array<i64: 8, 640>}, {pipeline_mode = #tpu.pipeline_mode<synchronous>, transform_indices = @transform_5, window_bounds = array<i64: 1, 640>}, {pipeline_mode = #tpu.pipeline_mode<synchronous>, transform_indices = @transform_6, window_bounds = array<i64: 5, 128, 16>}, {pipeline_mode = #tpu.pipeline_mode<synchronous>, transform_indices = @transform_7, window_bounds = array<i64: 5, 16>}, {transform_indices = @transform_8, window_bounds = array<i64: 5, 8>}]} {
    %c0 = arith.constant 0 : index
    %c0_0 = arith.constant 0 : index
    %0 = vector.load %arg1[%c0, %c0_0] : memref<8x16xf32, #tpu.memory_space<vmem>>, vector<8x16xf32>
    %c0_1 = arith.constant 0 : index
    %c0_2 = arith.constant 0 : index
    %1 = vector.load %arg4[%c0_1, %c0_2] : memref<16x640xf32, #tpu.memory_space<vmem>>, vector<16x640xf32>
    %cst = arith.constant dense<0.000000e+00> : vector<8x640xf32>
    %2 = tpu.matmul %0, %1, %cst {dimension_numbers = #tpu.dot_dimension_numbers<[1], [0], [0], [1], [0, 0, 1, 1], [], []>} : vector<8x16xf32>, vector<16x640xf32>, vector<8x640xf32> -> vector<8x640xf32>
    %c0_3 = arith.constant 0 : index
    %c0_4 = arith.constant 0 : index
    %3 = vector.load %arg2[%c0_3, %c0_4] : memref<8x8xf32, #tpu.memory_space<vmem>>, vector<8x8xf32>
    %c0_5 = arith.constant 0 : index
    %c0_6 = arith.constant 0 : index
    %4 = vector.load %arg5[%c0_5, %c0_6] : memref<8x640xf32, #tpu.memory_space<vmem>>, vector<8x640xf32>
    %cst_7 = arith.constant dense<0.000000e+00> : vector<8x640xf32>
    %5 = tpu.matmul %3, %4, %cst_7 {dimension_numbers = #tpu.dot_dimension_numbers<[1], [0], [0], [1], [0, 0, 1, 1], [], []>} : vector<8x8xf32>, vector<8x640xf32>, vector<8x640xf32> -> vector<8x640xf32>
    %6 = arith.addf %2, %5 : vector<8x640xf32>
    %c0_8 = arith.constant 0 : index
    %c0_9 = arith.constant 0 : index
    %7 = vector.load %arg6[%c0_8, %c0_9] : memref<1x640xf32, #tpu.memory_space<vmem>>, vector<1x640xf32>
    %8 = vector.broadcast %7 : vector<1x640xf32> to vector<8x640xf32>
    %9 = arith.addf %6, %8 : vector<8x640xf32>
    %cst_10 = arith.constant 0.000000e+00 : f32
    %10 = vector.broadcast %cst_10 : f32 to vector<8x640xf32>
    %11 = arith.maximumf %9, %10 : vector<8x640xf32>
    %c0_11 = arith.constant 0 : index
    %c0_12 = arith.constant 0 : index
    %12 = vector.load %arg3[%c0_11, %c0_12] : memref<8x16xf32, #tpu.memory_space<vmem>>, vector<8x16xf32>
    %13 = vector.extract_strided_slice %11 {offsets = [0, 0], sizes = [8, 128], strides = [1, 1]} : vector<8x640xf32> to vector<8x128xf32>
    %c0_13 = arith.constant 0 : index
    %c0_14 = arith.constant 0 : index
    %c0_15 = arith.constant 0 : index
    %14 = vector.load %arg7[%c0_13, %c0_14, %c0_15] : memref<5x128x16xf32, #tpu.memory_space<vmem>>, vector<1x128x16xf32>
    %15 = vector.shape_cast %14 : vector<1x128x16xf32> to vector<128x16xf32>
    %cst_16 = arith.constant dense<0.000000e+00> : vector<8x16xf32>
    %16 = tpu.matmul %13, %15, %cst_16 {dimension_numbers = #tpu.dot_dimension_numbers<[1], [0], [0], [1], [0, 0, 1, 1], [], []>} : vector<8x128xf32>, vector<128x16xf32>, vector<8x16xf32> -> vector<8x16xf32>
    %c0_17 = arith.constant 0 : index
    %c0_18 = arith.constant 0 : index
    %17 = vector.load %arg8[%c0_17, %c0_18] : memref<5x16xf32, #tpu.memory_space<vmem>>, vector<1x16xf32>
    %18 = vector.broadcast %17 : vector<1x16xf32> to vector<8x16xf32>
    %19 = arith.addf %16, %18 : vector<8x16xf32>
    %20 = arith.subf %12, %19 : vector<8x16xf32>
    %21 = arith.mulf %20, %20 : vector<8x16xf32>
    %cst_19 = arith.constant dense<0.000000e+00> : vector<8xf32>
    %22 = vector.multi_reduction <add>, %21, %cst_19 [1] : vector<8x16xf32> to vector<8xf32>
    %23 = vector.extract_strided_slice %11 {offsets = [0, 128], sizes = [8, 128], strides = [1, 1]} : vector<8x640xf32> to vector<8x128xf32>
    %c1 = arith.constant 1 : index
    %c0_20 = arith.constant 0 : index
    %c0_21 = arith.constant 0 : index
    %24 = vector.load %arg7[%c1, %c0_20, %c0_21] : memref<5x128x16xf32, #tpu.memory_space<vmem>>, vector<1x128x16xf32>
    %25 = vector.shape_cast %24 : vector<1x128x16xf32> to vector<128x16xf32>
    %cst_22 = arith.constant dense<0.000000e+00> : vector<8x16xf32>
    %26 = tpu.matmul %23, %25, %cst_22 {dimension_numbers = #tpu.dot_dimension_numbers<[1], [0], [0], [1], [0, 0, 1, 1], [], []>} : vector<8x128xf32>, vector<128x16xf32>, vector<8x16xf32> -> vector<8x16xf32>
    %c1_23 = arith.constant 1 : index
    %c0_24 = arith.constant 0 : index
    %27 = vector.load %arg8[%c1_23, %c0_24] : memref<5x16xf32, #tpu.memory_space<vmem>>, vector<1x16xf32>
    %28 = vector.broadcast %27 : vector<1x16xf32> to vector<8x16xf32>
    %29 = arith.addf %26, %28 : vector<8x16xf32>
    %30 = arith.subf %12, %29 : vector<8x16xf32>
    %31 = arith.mulf %30, %30 : vector<8x16xf32>
    %cst_25 = arith.constant dense<0.000000e+00> : vector<8xf32>
    %32 = vector.multi_reduction <add>, %31, %cst_25 [1] : vector<8x16xf32> to vector<8xf32>
    %33 = vector.extract_strided_slice %11 {offsets = [0, 256], sizes = [8, 128], strides = [1, 1]} : vector<8x640xf32> to vector<8x128xf32>
    %c2 = arith.constant 2 : index
    %c0_26 = arith.constant 0 : index
    %c0_27 = arith.constant 0 : index
    %34 = vector.load %arg7[%c2, %c0_26, %c0_27] : memref<5x128x16xf32, #tpu.memory_space<vmem>>, vector<1x128x16xf32>
    %35 = vector.shape_cast %34 : vector<1x128x16xf32> to vector<128x16xf32>
    %cst_28 = arith.constant dense<0.000000e+00> : vector<8x16xf32>
    %36 = tpu.matmul %33, %35, %cst_28 {dimension_numbers = #tpu.dot_dimension_numbers<[1], [0], [0], [1], [0, 0, 1, 1], [], []>} : vector<8x128xf32>, vector<128x16xf32>, vector<8x16xf32> -> vector<8x16xf32>
    %c2_29 = arith.constant 2 : index
    %c0_30 = arith.constant 0 : index
    %37 = vector.load %arg8[%c2_29, %c0_30] : memref<5x16xf32, #tpu.memory_space<vmem>>, vector<1x16xf32>
    %38 = vector.broadcast %37 : vector<1x16xf32> to vector<8x16xf32>
    %39 = arith.addf %36, %38 : vector<8x16xf32>
    %40 = arith.subf %12, %39 : vector<8x16xf32>
    %41 = arith.mulf %40, %40 : vector<8x16xf32>
    %cst_31 = arith.constant dense<0.000000e+00> : vector<8xf32>
    %42 = vector.multi_reduction <add>, %41, %cst_31 [1] : vector<8x16xf32> to vector<8xf32>
    %43 = vector.extract_strided_slice %11 {offsets = [0, 384], sizes = [8, 128], strides = [1, 1]} : vector<8x640xf32> to vector<8x128xf32>
    %c3 = arith.constant 3 : index
    %c0_32 = arith.constant 0 : index
    %c0_33 = arith.constant 0 : index
    %44 = vector.load %arg7[%c3, %c0_32, %c0_33] : memref<5x128x16xf32, #tpu.memory_space<vmem>>, vector<1x128x16xf32>
    %45 = vector.shape_cast %44 : vector<1x128x16xf32> to vector<128x16xf32>
    %cst_34 = arith.constant dense<0.000000e+00> : vector<8x16xf32>
    %46 = tpu.matmul %43, %45, %cst_34 {dimension_numbers = #tpu.dot_dimension_numbers<[1], [0], [0], [1], [0, 0, 1, 1], [], []>} : vector<8x128xf32>, vector<128x16xf32>, vector<8x16xf32> -> vector<8x16xf32>
    %c3_35 = arith.constant 3 : index
    %c0_36 = arith.constant 0 : index
    %47 = vector.load %arg8[%c3_35, %c0_36] : memref<5x16xf32, #tpu.memory_space<vmem>>, vector<1x16xf32>
    %48 = vector.broadcast %47 : vector<1x16xf32> to vector<8x16xf32>
    %49 = arith.addf %46, %48 : vector<8x16xf32>
    %50 = arith.subf %12, %49 : vector<8x16xf32>
    %51 = arith.mulf %50, %50 : vector<8x16xf32>
    %cst_37 = arith.constant dense<0.000000e+00> : vector<8xf32>
    %52 = vector.multi_reduction <add>, %51, %cst_37 [1] : vector<8x16xf32> to vector<8xf32>
    %53 = vector.extract_strided_slice %11 {offsets = [0, 512], sizes = [8, 128], strides = [1, 1]} : vector<8x640xf32> to vector<8x128xf32>
    %c4 = arith.constant 4 : index
    %c0_38 = arith.constant 0 : index
    %c0_39 = arith.constant 0 : index
    %54 = vector.load %arg7[%c4, %c0_38, %c0_39] : memref<5x128x16xf32, #tpu.memory_space<vmem>>, vector<1x128x16xf32>
    %55 = vector.shape_cast %54 : vector<1x128x16xf32> to vector<128x16xf32>
    %cst_40 = arith.constant dense<0.000000e+00> : vector<8x16xf32>
    %56 = tpu.matmul %53, %55, %cst_40 {dimension_numbers = #tpu.dot_dimension_numbers<[1], [0], [0], [1], [0, 0, 1, 1], [], []>} : vector<8x128xf32>, vector<128x16xf32>, vector<8x16xf32> -> vector<8x16xf32>
    %c4_41 = arith.constant 4 : index
    %c0_42 = arith.constant 0 : index
    %57 = vector.load %arg8[%c4_41, %c0_42] : memref<5x16xf32, #tpu.memory_space<vmem>>, vector<1x16xf32>
    %58 = vector.broadcast %57 : vector<1x16xf32> to vector<8x16xf32>
    %59 = arith.addf %56, %58 : vector<8x16xf32>
    %60 = arith.subf %12, %59 : vector<8x16xf32>
    %61 = arith.mulf %60, %60 : vector<8x16xf32>
    %cst_43 = arith.constant dense<0.000000e+00> : vector<8xf32>
    %62 = vector.multi_reduction <add>, %61, %cst_43 [1] : vector<8x16xf32> to vector<8xf32>
    %63 = vector.shape_cast %22 : vector<8xf32> to vector<1x8xf32>
    %64 = vector.shape_cast %32 : vector<8xf32> to vector<1x8xf32>
    %65 = vector.shape_cast %42 : vector<8xf32> to vector<1x8xf32>
    %66 = vector.shape_cast %52 : vector<8xf32> to vector<1x8xf32>
    %67 = vector.shape_cast %62 : vector<8xf32> to vector<1x8xf32>
    %68 = tpu.concatenate %63, %64, %65, %66, %67 in 0 : vector<1x8xf32>, vector<1x8xf32>, vector<1x8xf32>, vector<1x8xf32>, vector<1x8xf32> -> vector<5x8xf32>
    %69 = math.sqrt %68 : vector<5x8xf32>
    %c0_44 = arith.constant 0 : index
    %c0_45 = arith.constant 0 : index
    %70 = vector.load %arg9[%c0_44, %c0_45] : memref<5x8xf32, #tpu.memory_space<vmem>>, vector<5x8xf32>
    tpu.vector_store %arg9[%c0_44, %c0_45], %69 {strides = array<i32>} : memref<5x8xf32, #tpu.memory_space<vmem>>, vector<5x8xf32>,
    return
  }
  func.func @transform_0(%arg0: i32) -> (i32, i32) {
    %c0_i32 = arith.constant 0 : i32
    %c0_i32_0 = arith.constant 0 : i32
    return %arg0, %c0_i32 : i32, i32
  }
  func.func @transform_1(%arg0: i32) -> (i32, i32) {
    %c0_i32 = arith.constant 0 : i32
    %c0_i32_0 = arith.constant 0 : i32
    return %arg0, %c0_i32 : i32, i32
  }
  func.func @transform_2(%arg0: i32) -> (i32, i32) {
    %c0_i32 = arith.constant 0 : i32
    %c0_i32_0 = arith.constant 0 : i32
    return %arg0, %c0_i32 : i32, i32
  }
  func.func @transform_3(%arg0: i32) -> (i32, i32) {
    %c0_i32 = arith.constant 0 : i32
    %c0_i32_0 = arith.constant 0 : i32
    %c0_i32_1 = arith.constant 0 : i32
    return %c0_i32, %c0_i32_0 : i32, i32
  }
  func.func @transform_4(%arg0: i32) -> (i32, i32) {
    %c0_i32 = arith.constant 0 : i32
    %c0_i32_0 = arith.constant 0 : i32
    %c0_i32_1 = arith.constant 0 : i32
    return %c0_i32, %c0_i32_0 : i32, i32
  }
  func.func @transform_5(%arg0: i32) -> (i32, i32) {
    %c0_i32 = arith.constant 0 : i32
    %c0_i32_0 = arith.constant 0 : i32
    %c0_i32_1 = arith.constant 0 : i32
    return %c0_i32, %c0_i32_0 : i32, i32
  }
  func.func @transform_6(%arg0: i32) -> (i32, i32, i32) {
    %c0_i32 = arith.constant 0 : i32
    %c0_i32_0 = arith.constant 0 : i32
    %c0_i32_1 = arith.constant 0 : i32
    %c0_i32_2 = arith.constant 0 : i32
    return %c0_i32, %c0_i32_0, %c0_i32_1 : i32, i32, i32
  }
  func.func @transform_7(%arg0: i32) -> (i32, i32) {
    %c0_i32 = arith.constant 0 : i32
    %c0_i32_0 = arith.constant 0 : i32
    %c0_i32_1 = arith.constant 0 : i32
    return %c0_i32, %c0_i32_0 : i32, i32
  }
  func.func @transform_8(%arg0: i32) -> (i32, i32) {
    %c0_i32 = arith.constant 0 : i32
    %c0_i32_0 = arith.constant 0 : i32
    return %c0_i32, %arg0 : i32, i32
  }
}

</mosaic_0001>

<llo_original>
// kernel: tpu_custom_call.1
$region0: #{tpu_custom_call.1}
  #allocation0 [shape = 'u32[]', space=smem, size = 0x4, offset = 0x4, fixed_abs, tag = 'smem constant byte address 0x4 - core index']
  #allocation1 [shape = 'u32[72,128]{1,0:T(1,128)}', space=vmem, size = 0x9000, scoped, tag = 'internal scratch']
  %s0 = inlined_call_operand.vmem [shape: f32[8,16], index: 0, kind: input, shape index: {}]
  %s1 = inlined_call_operand.vmem [shape: f32[8,8], index: 1, kind: input, shape index: {}]
  %s2 = inlined_call_operand.vmem [shape: f32[8,16], index: 2, kind: input, shape index: {}]
  %s3 = inlined_call_operand.vmem [shape: f32[16,640], index: 3, kind: input, shape index: {}]
  %s4 = inlined_call_operand.vmem [shape: f32[8,640], index: 4, kind: input, shape index: {}]
  %s5 = inlined_call_operand.vmem [shape: f32[1,640], index: 5, kind: input, shape index: {}]
  %s6 = inlined_call_operand.vmem [shape: f32[5,128,16], index: 6, kind: input, shape index: {}]
  %s7 = inlined_call_operand.vmem [shape: f32[5,16], index: 7, kind: input, shape index: {}]
  %s8 = inlined_call_operand.hbm [shape: f32[5,8], index: 8, kind: output, shape index: {}]
  %s9 = sld [smem:[#allocation0]]
  $region42: #{tpu_custom_call.1} parent=0
    _
  %s11 = ssub.s32 1, %s9
  %s12 = scalar_select 0, %s11, %s9
  $region1: #{tpu_custom_call.1} parent=0
    #allocation2 [shape = 'u8[4096]{0}', space=vmem, size = 0x1000, scoped, tag = 'output window, operand 0, single buffered']
    #allocation3 [shape = 's32[1]{0}', space=sflag, size = 0x4, scoped, tag = 'scoped memory for tpu_custom_call.1']
    %13 = vsyncpa [#allocation3], 0
    // Predicated region
    $region2: #{tpu_custom_call.1} parent=1 // pred_check
      _
    $region3: #{tpu_custom_call.1} parent=1 // pred_check_branch
      %15 = sbr.rel (0) target = $region5
    $region4: #{tpu_custom_call.1} parent=1 // pred_region
      _
    $region5: #{tpu_custom_call.1} parent=1 // pred_fallthru
      _
    // Predicated region
    $region6: #{tpu_custom_call.1} parent=1 // pred_check
      _
    $region7: #{tpu_custom_call.1} parent=1 // pred_check_branch
      %17 = sbr.rel (0) target = $region9
    $region8: #{tpu_custom_call.1} parent=1 // pred_region
      _
    $region9: #{tpu_custom_call.1} parent=1 // pred_fallthru
      _
    // Predicated region
    $region10: #{tpu_custom_call.1} parent=1 // pred_check
      _
    $region11: #{tpu_custom_call.1} parent=1 // pred_check_branch
      %19 = sbr.rel (0) target = $region13
    $region12: #{tpu_custom_call.1} parent=1 // pred_region
      _
    $region13: #{tpu_custom_call.1} parent=1 // pred_fallthru
      _
    // Predicated region
    $region14: #{tpu_custom_call.1} parent=1 // pred_check
      _
    $region15: #{tpu_custom_call.1} parent=1 // pred_check_branch
      %21 = sbr.rel (0) target = $region17
    $region16: #{tpu_custom_call.1} parent=1 // pred_region
      _
    $region17: #{tpu_custom_call.1} parent=1 // pred_fallthru
      _
    // Predicated region
    $region18: #{tpu_custom_call.1} parent=1 // pred_check
      _
    $region19: #{tpu_custom_call.1} parent=1 // pred_check_branch
      %23 = sbr.rel (0) target = $region21
    $region20: #{tpu_custom_call.1} parent=1 // pred_region
      _
    $region21: #{tpu_custom_call.1} parent=1 // pred_fallthru
      _
    // Predicated region
    $region22: #{tpu_custom_call.1} parent=1 // pred_check
      _
    $region23: #{tpu_custom_call.1} parent=1 // pred_check_branch
      %25 = sbr.rel (0) target = $region25
    $region24: #{tpu_custom_call.1} parent=1 // pred_region
      _
    $region25: #{tpu_custom_call.1} parent=1 // pred_fallthru
      _
    // Predicated region
    $region26: #{tpu_custom_call.1} parent=1 // pred_check
      _
    $region27: #{tpu_custom_call.1} parent=1 // pred_check_branch
      %27 = sbr.rel (0) target = $region29
    $region28: #{tpu_custom_call.1} parent=1 // pred_region
      _
    $region29: #{tpu_custom_call.1} parent=1 // pred_fallthru
      _
    // Predicated region
    $region30: #{tpu_custom_call.1} parent=1 // pred_check
      _
    $region31: #{tpu_custom_call.1} parent=1 // pred_check_branch
      %29 = sbr.rel (0) target = $region33
    $region32: #{tpu_custom_call.1} parent=1 // pred_region
      _
    $region33: #{tpu_custom_call.1} parent=1 // pred_fallthru
      _
    %v30 = vld [vmem:[%s0] sm:$0xff]
    %v31 = vld [vmem:[%s3] sm:$0xff]
    %v32 = vld [vmem:[%s3 + $0x8] sm:$0xff]
    %v33 = vld [vmem:[%s3 + $0x10] sm:$0xff]
    %v34 = vld [vmem:[%s3 + $0x18] sm:$0xff]
    %v35 = vld [vmem:[%s3 + $0x20] sm:$0xff]
    %v36 = vld [vmem:[%s3 + $0x28] sm:$0xff]
    %v37 = vld [vmem:[%s3 + $0x30] sm:$0xff]
    %v38 = vld [vmem:[%s3 + $0x38] sm:$0xff]
    %v39 = vld [vmem:[%s3 + $0x40] sm:$0xff]
    %v40 = vld [vmem:[%s3 + $0x48] sm:$0xff]
    %v41 = vld [vmem:[%s1] sm:$0xff]
    %v42 = vld [vmem:[%s4] sm:$0xff]
    %v43 = vld [vmem:[%s4 + $0x8] sm:$0xff]
    %v44 = vld [vmem:[%s4 + $0x10] sm:$0xff]
    %v45 = vld [vmem:[%s4 + $0x18] sm:$0xff]
    %v46 = vld [vmem:[%s4 + $0x20] sm:$0xff]
    %vm47 = vcmask 64512
    %v49 = vsel %vm47, %v41, 0
    %51 = vmatpush.msra.mxu0 0.0
    %52 = vmatpush.msra.mxu0 0.0
    %53 = vmatpush.msra.mxu0 0.0
    %54 = vmatpush.msra.mxu0 0.0
    %55 = vmatpush.msra.mxu0 0.0
    %56 = vmatpush.msra.mxu0 0.0
    %57 = vmatpush.msra.mxu0 0.0
    %58 = vmatpush.msra.mxu0 0.0
    %59 = vmatpush.msra.mxu0 0.0
    %60 = vmatpush.msra.mxu0 0.0
    %61 = vmatpush.msra.mxu0 0.0
    %62 = vmatpush.msra.mxu0 0.0
    %63 = vmatpush.msra.mxu0 0.0
    %64 = vmatpush.msra.mxu0 0.0
    %65 = vmatpush.msra.mxu0 0.0
    %66 = vmatpush.msra.mxu0 %v42
    %67 = vmatmul.f32.gmra.mxu0 %v49
    %v68 = vpop.f32.mrf.mxu0
    %v69 = vadd.f32 0.0, %v68
    %70 = vdwg.mxu0
    %71 = vmatpush.msra.mxu0 0.0
    %72 = vmatpush.msra.mxu0 0.0
    %73 = vmatpush.msra.mxu0 0.0
    %74 = vmatpush.msra.mxu0 0.0
    %75 = vmatpush.msra.mxu0 0.0
    %76 = vmatpush.msra.mxu0 0.0
    %77 = vmatpush.msra.mxu0 0.0
    %78 = vmatpush.msra.mxu0 0.0
    %79 = vmatpush.msra.mxu0 0.0
    %80 = vmatpush.msra.mxu0 0.0
    %81 = vmatpush.msra.mxu0 0.0
    %82 = vmatpush.msra.mxu0 0.0
    %83 = vmatpush.msra.mxu0 0.0
    %84 = vmatpush.msra.mxu0 0.0
    %85 = vmatpush.msra.mxu0 0.0
    %86 = vmatpush.msra.mxu0 %v43
    %87 = vmatmul.f32.gmra.mxu0 %v49
    %v88 = vpop.f32.mrf.mxu0
    %v89 = vadd.f32 0.0, %v88
    %90 = vdwg.mxu0
    %91 = vmatpush.msra.mxu0 0.0
    %92 = vmatpush.msra.mxu0 0.0
    %93 = vmatpush.msra.mxu0 0.0
    %94 = vmatpush.msra.mxu0 0.0
    %95 = vmatpush.msra.mxu0 0.0
    %96 = vmatpush.msra.mxu0 0.0
    %97 = vmatpush.msra.mxu0 0.0
    %98 = vmatpush.msra.mxu0 0.0
    %99 = vmatpush.msra.mxu0 0.0
    %100 = vmatpush.msra.mxu0 0.0
    %101 = vmatpush.msra.mxu0 0.0
    %102 = vmatpush.msra.mxu0 0.0
    %103 = vmatpush.msra.mxu0 0.0
    %104 = vmatpush.msra.mxu0 0.0
    %105 = vmatpush.msra.mxu0 0.0
    %106 = vmatpush.msra.mxu0 %v44
    %107 = vmatmul.f32.gmra.mxu0 %v49
    %v108 = vpop.f32.mrf.mxu0
    %v109 = vadd.f32 0.0, %v108
    %110 = vdwg.mxu0
    %111 = vmatpush.msra.mxu0 0.0
    %112 = vmatpush.msra.mxu0 0.0
    %113 = vmatpush.msra.mxu0 0.0
    %114 = vmatpush.msra.mxu0 0.0
    %115 = vmatpush.msra.mxu0 0.0
    %116 = vmatpush.msra.mxu0 0.0
    %117 = vmatpush.msra.mxu0 0.0
    %118 = vmatpush.msra.mxu0 0.0
    %119 = vmatpush.msra.mxu0 0.0
    %120 = vmatpush.msra.mxu0 0.0
    %121 = vmatpush.msra.mxu0 0.0
    %122 = vmatpush.msra.mxu0 0.0
    %123 = vmatpush.msra.mxu0 0.0
    %124 = vmatpush.msra.mxu0 0.0
    %125 = vmatpush.msra.mxu0 0.0
    %126 = vmatpush.msra.mxu0 %v45
    %127 = vmatmul.f32.gmra.mxu0 %v49
    %v128 = vpop.f32.mrf.mxu0
    %v129 = vadd.f32 0.0, %v128
    %130 = vdwg.mxu0
    %131 = vmatpush.msra.mxu0 0.0
    %132 = vmatpush.msra.mxu0 0.0
    %133 = vmatpush.msra.mxu0 0.0
    %134 = vmatpush.msra.mxu0 0.0
    %135 = vmatpush.msra.mxu0 0.0
    %136 = vmatpush.msra.mxu0 0.0
    %137 = vmatpush.msra.mxu0 0.0
    %138 = vmatpush.msra.mxu0 0.0
    %139 = vmatpush.msra.mxu0 0.0
    %140 = vmatpush.msra.mxu0 0.0
    %141 = vmatpush.msra.mxu0 0.0
    %142 = vmatpush.msra.mxu0 0.0
    %143 = vmatpush.msra.mxu0 0.0
    %144 = vmatpush.msra.mxu0 0.0
    %145 = vmatpush.msra.mxu0 0.0
    %146 = vmatpush.msra.mxu0 %v46
    %147 = vmatmul.f32.gmra.mxu0 %v49
    %v148 = vpop.f32.mrf.mxu0
    %v149 = vadd.f32 0.0, %v148
    %150 = vdwg.mxu0
    %vm151 = vcmask 130048
    %v153 = vsel %vm151, %v30, 0
    %155 = vmatpush.msra.mxu0 0.0
    %156 = vmatpush.msra.mxu0 0.0
    %157 = vmatpush.msra.mxu0 0.0
    %158 = vmatpush.msra.mxu0 0.0
    %159 = vmatpush.msra.mxu0 0.0
    %160 = vmatpush.msra.mxu0 0.0
    %161 = vmatpush.msra.mxu0 0.0
    %162 = vmatpush.msra.mxu0 0.0
    %163 = vmatpush.msra.mxu0 0.0
    %164 = vmatpush.msra.mxu0 0.0
    %165 = vmatpush.msra.mxu0 0.0
    %166 = vmatpush.msra.mxu0 0.0
    %167 = vmatpush.msra.mxu0 0.0
    %168 = vmatpush.msra.mxu0 0.0
    %169 = vmatpush.msra.mxu0 %v36
    %170 = vmatpush.msra.mxu0 %v31
    %171 = vmatmul.f32.gmra.mxu0 %v153
    %v172 = vpop.f32.mrf.mxu0
    %v173 = vadd.f32 %v69, %v172
    %174 = vdwg.mxu0
    %175 = vmatpush.msra.mxu0 0.0
    %176 = vmatpush.msra.mxu0 0.0
    %177 = vmatpush.msra.mxu0 0.0
    %178 = vmatpush.msra.mxu0 0.0
    %179 = vmatpush.msra.mxu0 0.0
    %180 = vmatpush.msra.mxu0 0.0
    %181 = vmatpush.msra.mxu0 0.0
    %182 = vmatpush.msra.mxu0 0.0
    %183 = vmatpush.msra.mxu0 0.0
    %184 = vmatpush.msra.mxu0 0.0
    %185 = vmatpush.msra.mxu0 0.0
    %186 = vmatpush.msra.mxu0 0.0
    %187 = vmatpush.msra.mxu0 0.0
    %188 = vmatpush.msra.mxu0 0.0
    %189 = vmatpush.msra.mxu0 %v37
    %190 = vmatpush.msra.mxu0 %v32
    %191 = vmatmul.f32.gmra.mxu0 %v153
    %v192 = vpop.f32.mrf.mxu0
    %v193 = vadd.f32 %v89, %v192
    %194 = vdwg.mxu0
    %195 = vmatpush.msra.mxu0 0.0
    %196 = vmatpush.msra.mxu0 0.0
    %197 = vmatpush.msra.mxu0 0.0
    %198 = vmatpush.msra.mxu0 0.0
    %199 = vmatpush.msra.mxu0 0.0
    %200 = vmatpush.msra.mxu0 0.0
    %201 = vmatpush.msra.mxu0 0.0
    %202 = vmatpush.msra.mxu0 0.0
    %203 = vmatpush.msra.mxu0 0.0
    %204 = vmatpush.msra.mxu0 0.0
    %205 = vmatpush.msra.mxu0 0.0
    %206 = vmatpush.msra.mxu0 0.0
    %207 = vmatpush.msra.mxu0 0.0
    %208 = vmatpush.msra.mxu0 0.0
    %209 = vmatpush.msra.mxu0 %v38
    %210 = vmatpush.msra.mxu0 %v33
    %211 = vmatmul.f32.gmra.mxu0 %v153
    %v212 = vpop.f32.mrf.mxu0
    %v213 = vadd.f32 %v109, %v212
    %214 = vdwg.mxu0
    %215 = vmatpush.msra.mxu0 0.0
    %216 = vmatpush.msra.mxu0 0.0
    %217 = vmatpush.msra.mxu0 0.0
    %218 = vmatpush.msra.mxu0 0.0
    %219 = vmatpush.msra.mxu0 0.0
    %220 = vmatpush.msra.mxu0 0.0
    %221 = vmatpush.msra.mxu0 0.0
    %222 = vmatpush.msra.mxu0 0.0
    %223 = vmatpush.msra.mxu0 0.0
    %224 = vmatpush.msra.mxu0 0.0
    %225 = vmatpush.msra.mxu0 0.0
    %226 = vmatpush.msra.mxu0 0.0
    %227 = vmatpush.msra.mxu0 0.0
    %228 = vmatpush.msra.mxu0 0.0
    %229 = vmatpush.msra.mxu0 %v39
    %230 = vmatpush.msra.mxu0 %v34
    %231 = vmatmul.f32.gmra.mxu0 %v153
    %v232 = vpop.f32.mrf.mxu0
    %v233 = vadd.f32 %v129, %v232
    %234 = vdwg.mxu0
    %235 = vmatpush.msra.mxu0 0.0
    %236 = vmatpush.msra.mxu0 0.0
    %237 = vmatpush.msra.mxu0 0.0
    %238 = vmatpush.msra.mxu0 0.0
    %239 = vmatpush.msra.mxu0 0.0
    %240 = vmatpush.msra.mxu0 0.0
    %241 = vmatpush.msra.mxu0 0.0
    %242 = vmatpush.msra.mxu0 0.0
    %243 = vmatpush.msra.mxu0 0.0
    %244 = vmatpush.msra.mxu0 0.0
    %245 = vmatpush.msra.mxu0 0.0
    %246 = vmatpush.msra.mxu0 0.0
    %247 = vmatpush.msra.mxu0 0.0
    %248 = vmatpush.msra.mxu0 0.0
    %249 = vmatpush.msra.mxu0 %v40
    %250 = vmatpush.msra.mxu0 %v35
    %251 = vmatmul.f32.gmra.mxu0 %v153
    %v252 = vpop.f32.mrf.mxu0
    %v253 = vadd.f32 %v149, %v252
    %254 = vdwg.mxu0
    %v255 = vld [vmem:[%s5] sm:$0x1f]
    %v257 = vperm.slane %v255, 0
    %v258 = vperm.slane %v255, 1
    %v259 = vperm.slane %v255, 2
    %v260 = vperm.slane %v255, 3
    %v261 = vperm.slane %v255, 4
    %v267 = vadd.f32 %v173, %v257
    %v268 = vadd.f32 %v193, %v258
    %v269 = vadd.f32 %v213, %v259
    %v270 = vadd.f32 %v233, %v260
    %v271 = vadd.f32 %v253, %v261
    %v272 = vmax.f32 %v267, 0.0
    %v273 = vmax.f32 %v268, 0.0
    %v274 = vmax.f32 %v269, 0.0
    %v275 = vmax.f32 %v270, 0.0
    %v276 = vmax.f32 %v271, 0.0
    %v277 = vld [vmem:[%s2] sm:$0xff]
    %v278 = vld [vmem:[%s6] sm:$0xff]
    %v279 = vld [vmem:[%s6 + $0x8] sm:$0xff]
    %v280 = vld [vmem:[%s6 + $0x10] sm:$0xff]
    %v281 = vld [vmem:[%s6 + $0x18] sm:$0xff]
    %v282 = vld [vmem:[%s6 + $0x20] sm:$0xff]
    %v283 = vld [vmem:[%s6 + $0x28] sm:$0xff]
    %v284 = vld [vmem:[%s6 + $0x30] sm:$0xff]
    %v285 = vld [vmem:[%s6 + $0x38] sm:$0xff]
    %v286 = vld [vmem:[%s6 + $0x40] sm:$0xff]
    %v287 = vld [vmem:[%s6 + $0x48] sm:$0xff]
    %v288 = vld [vmem:[%s6 + $0x50] sm:$0xff]
    %v289 = vld [vmem:[%s6 + $0x58] sm:$0xff]
    %v290 = vld [vmem:[%s6 + $0x60] sm:$0xff]
    %v291 = vld [vmem:[%s6 + $0x68] sm:$0xff]
    %v292 = vld [vmem:[%s6 + $0x70] sm:$0xff]
    %v293 = vld [vmem:[%s6 + $0x78] sm:$0xff]
    %v294 = vld [vmem:[%s7] sm:$0x1]
    %v295 = vperm.slane %v294, 0
    %296 = vmatpush.msra.mxu0 %v293
    %297 = vmatpush.msra.mxu0 %v292
    %298 = vmatpush.msra.mxu0 %v291
    %299 = vmatpush.msra.mxu0 %v290
    %300 = vmatpush.msra.mxu0 %v289
    %301 = vmatpush.msra.mxu0 %v288
    %302 = vmatpush.msra.mxu0 %v287
    %303 = vmatpush.msra.mxu0 %v286
    %304 = vmatpush.msra.mxu0 %v285
    %305 = vmatpush.msra.mxu0 %v284
    %306 = vmatpush.msra.mxu0 %v283
    %307 = vmatpush.msra.mxu0 %v282
    %308 = vmatpush.msra.mxu0 %v281
    %309 = vmatpush.msra.mxu0 %v280
    %310 = vmatpush.msra.mxu0 %v279
    %311 = vmatpush.msra.mxu0 %v278
    %312 = vmatmul.f32.gmra.mxu0 %v272
    %v313 = vpop.f32.mrf.mxu0
    %v314 = vadd.f32 %v295, %v313
    %315 = vdwg.mxu0
    %v316 = vsub.f32 %v277, %v314
    %v317 = vmul.f32 %v316, %v316
    %v318 = vsel %vm151, %v317, 0.0
    %319 = vadd.xlane.f32.xlu0 %v318
    %v320 = vpop.xlane.xlu0 %319
    %s321 = scalar_lea.vmem %s6, 128
    %v322 = vld [vmem:[%s321] sm:$0xff]
    %v323 = vld [vmem:[%s321 + $0x8] sm:$0xff]
    %v324 = vld [vmem:[%s321 + $0x10] sm:$0xff]
    %v325 = vld [vmem:[%s321 + $0x18] sm:$0xff]
    %v326 = vld [vmem:[%s321 + $0x20] sm:$0xff]
    %v327 = vld [vmem:[%s321 + $0x28] sm:$0xff]
    %v328 = vld [vmem:[%s321 + $0x30] sm:$0xff]
    %v329 = vld [vmem:[%s321 + $0x38] sm:$0xff]
    %v330 = vld [vmem:[%s321 + $0x40] sm:$0xff]
    %v331 = vld [vmem:[%s321 + $0x48] sm:$0xff]
    %v332 = vld [vmem:[%s321 + $0x50] sm:$0xff]
    %v333 = vld [vmem:[%s321 + $0x58] sm:$0xff]
    %v334 = vld [vmem:[%s321 + $0x60] sm:$0xff]
    %v335 = vld [vmem:[%s321 + $0x68] sm:$0xff]
    %v336 = vld [vmem:[%s321 + $0x70] sm:$0xff]
    %v337 = vld [vmem:[%s321 + $0x78] sm:$0xff]
    %v338 = vld [vmem:[%s7 + $0x1] sm:$0x1]
    %v339 = vperm.slane %v338, 0
    %340 = vmatpush.msra.mxu0 %v337
    %341 = vmatpush.msra.mxu0 %v336
    %342 = vmatpush.msra.mxu0 %v335
    %343 = vmatpush.msra.mxu0 %v334
    %344 = vmatpush.msra.mxu0 %v333
    %345 = vmatpush.msra.mxu0 %v332
    %346 = vmatpush.msra.mxu0 %v331
    %347 = vmatpush.msra.mxu0 %v330
    %348 = vmatpush.msra.mxu0 %v329
    %349 = vmatpush.msra.mxu0 %v328
    %350 = vmatpush.msra.mxu0 %v327
    %351 = vmatpush.msra.mxu0 %v326
    %352 = vmatpush.msra.mxu0 %v325
    %353 = vmatpush.msra.mxu0 %v324
    %354 = vmatpush.msra.mxu0 %v323
    %355 = vmatpush.msra.mxu0 %v322
    %356 = vmatmul.f32.gmra.mxu0 %v273
    %v357 = vpop.f32.mrf.mxu0
    %v358 = vadd.f32 %v339, %v357
    %359 = vdwg.mxu0
    %v360 = vsub.f32 %v277, %v358
    %v361 = vmul.f32 %v360, %v360
    %v362 = vsel %vm151, %v361, 0.0
    %363 = vadd.xlane.f32.xlu0 %v362
    %v364 = vpop.xlane.xlu0 %363
    %s365 = scalar_lea.vmem %s6, 256
    %v366 = vld [vmem:[%s365] sm:$0xff]
    %v367 = vld [vmem:[%s365 + $0x8] sm:$0xff]
    %v368 = vld [vmem:[%s365 + $0x10] sm:$0xff]
    %v369 = vld [vmem:[%s365 + $0x18] sm:$0xff]
    %v370 = vld [vmem:[%s365 + $0x20] sm:$0xff]
    %v371 = vld [vmem:[%s365 + $0x28] sm:$0xff]
    %v372 = vld [vmem:[%s365 + $0x30] sm:$0xff]
    %v373 = vld [vmem:[%s365 + $0x38] sm:$0xff]
    %v374 = vld [vmem:[%s365 + $0x40] sm:$0xff]
    %v375 = vld [vmem:[%s365 + $0x48] sm:$0xff]
    %v376 = vld [vmem:[%s365 + $0x50] sm:$0xff]
    %v377 = vld [vmem:[%s365 + $0x58] sm:$0xff]
    %v378 = vld [vmem:[%s365 + $0x60] sm:$0xff]
    %v379 = vld [vmem:[%s365 + $0x68] sm:$0xff]
    %v380 = vld [vmem:[%s365 + $0x70] sm:$0xff]
    %v381 = vld [vmem:[%s365 + $0x78] sm:$0xff]
    %v382 = vld [vmem:[%s7 + $0x2] sm:$0x1]
    %v383 = vperm.slane %v382, 0
    %384 = vmatpush.msra.mxu0 %v381
    %385 = vmatpush.msra.mxu0 %v380
    %386 = vmatpush.msra.mxu0 %v379
    %387 = vmatpush.msra.mxu0 %v378
    %388 = vmatpush.msra.mxu0 %v377
    %389 = vmatpush.msra.mxu0 %v376
    %390 = vmatpush.msra.mxu0 %v375
    %391 = vmatpush.msra.mxu0 %v374
    %392 = vmatpush.msra.mxu0 %v373
    %393 = vmatpush.msra.mxu0 %v372
    %394 = vmatpush.msra.mxu0 %v371
    %395 = vmatpush.msra.mxu0 %v370
    %396 = vmatpush.msra.mxu0 %v369
    %397 = vmatpush.msra.mxu0 %v368
    %398 = vmatpush.msra.mxu0 %v367
    %399 = vmatpush.msra.mxu0 %v366
    %400 = vmatmul.f32.gmra.mxu0 %v274
    %v401 = vpop.f32.mrf.mxu0
    %v402 = vadd.f32 %v383, %v401
    %403 = vdwg.mxu0
    %v404 = vsub.f32 %v277, %v402
    %v405 = vmul.f32 %v404, %v404
    %v406 = vsel %vm151, %v405, 0.0
    %407 = vadd.xlane.f32.xlu0 %v406
    %v408 = vpop.xlane.xlu0 %407
    %s409 = scalar_lea.vmem %s6, 384
    %v410 = vld [vmem:[%s409] sm:$0xff]
    %v411 = vld [vmem:[%s409 + $0x8] sm:$0xff]
    %v412 = vld [vmem:[%s409 + $0x10] sm:$0xff]
    %v413 = vld [vmem:[%s409 + $0x18] sm:$0xff]
    %v414 = vld [vmem:[%s409 + $0x20] sm:$0xff]
    %v415 = vld [vmem:[%s409 + $0x28] sm:$0xff]
    %v416 = vld [vmem:[%s409 + $0x30] sm:$0xff]
    %v417 = vld [vmem:[%s409 + $0x38] sm:$0xff]
    %v418 = vld [vmem:[%s409 + $0x40] sm:$0xff]
    %v419 = vld [vmem:[%s409 + $0x48] sm:$0xff]
    %v420 = vld [vmem:[%s409 + $0x50] sm:$0xff]
    %v421 = vld [vmem:[%s409 + $0x58] sm:$0xff]
    %v422 = vld [vmem:[%s409 + $0x60] sm:$0xff]
    %v423 = vld [vmem:[%s409 + $0x68] sm:$0xff]
    %v424 = vld [vmem:[%s409 + $0x70] sm:$0xff]
    %v425 = vld [vmem:[%s409 + $0x78] sm:$0xff]
    %v426 = vld [vmem:[%s7 + $0x3] sm:$0x1]
    %v427 = vperm.slane %v426, 0
    %428 = vmatpush.msra.mxu0 %v425
    %429 = vmatpush.msra.mxu0 %v424
    %430 = vmatpush.msra.mxu0 %v423
    %431 = vmatpush.msra.mxu0 %v422
    %432 = vmatpush.msra.mxu0 %v421
    %433 = vmatpush.msra.mxu0 %v420
    %434 = vmatpush.msra.mxu0 %v419
    %435 = vmatpush.msra.mxu0 %v418
    %436 = vmatpush.msra.mxu0 %v417
    %437 = vmatpush.msra.mxu0 %v416
    %438 = vmatpush.msra.mxu0 %v415
    %439 = vmatpush.msra.mxu0 %v414
    %440 = vmatpush.msra.mxu0 %v413
    %441 = vmatpush.msra.mxu0 %v412
    %442 = vmatpush.msra.mxu0 %v411
    %443 = vmatpush.msra.mxu0 %v410
    %444 = vmatmul.f32.gmra.mxu0 %v275
    %v445 = vpop.f32.mrf.mxu0
    %v446 = vadd.f32 %v427, %v445
    %447 = vdwg.mxu0
    %v448 = vsub.f32 %v277, %v446
    %v449 = vmul.f32 %v448, %v448
    %v450 = vsel %vm151, %v449, 0.0
    %451 = vadd.xlane.f32.xlu0 %v450
    %v452 = vpop.xlane.xlu0 %451
    %s453 = scalar_lea.vmem %s6, 512
    %v454 = vld [vmem:[%s453] sm:$0xff]
    %v455 = vld [vmem:[%s453 + $0x8] sm:$0xff]
    %v456 = vld [vmem:[%s453 + $0x10] sm:$0xff]
    %v457 = vld [vmem:[%s453 + $0x18] sm:$0xff]
    %v458 = vld [vmem:[%s453 + $0x20] sm:$0xff]
    %v459 = vld [vmem:[%s453 + $0x28] sm:$0xff]
    %v460 = vld [vmem:[%s453 + $0x30] sm:$0xff]
    %v461 = vld [vmem:[%s453 + $0x38] sm:$0xff]
    %v462 = vld [vmem:[%s453 + $0x40] sm:$0xff]
    %v463 = vld [vmem:[%s453 + $0x48] sm:$0xff]
    %v464 = vld [vmem:[%s453 + $0x50] sm:$0xff]
    %v465 = vld [vmem:[%s453 + $0x58] sm:$0xff]
    %v466 = vld [vmem:[%s453 + $0x60] sm:$0xff]
    %v467 = vld [vmem:[%s453 + $0x68] sm:$0xff]
    %v468 = vld [vmem:[%s453 + $0x70] sm:$0xff]
    %v469 = vld [vmem:[%s453 + $0x78] sm:$0xff]
    %v470 = vld [vmem:[%s7 + $0x4] sm:$0x1]
    %v471 = vperm.slane %v470, 0
    %472 = vmatpush.msra.mxu0 %v469
    %473 = vmatpush.msra.mxu0 %v468
    %474 = vmatpush.msra.mxu0 %v467
    %475 = vmatpush.msra.mxu0 %v466
    %476 = vmatpush.msra.mxu0 %v465
    %477 = vmatpush.msra.mxu0 %v464
    %478 = vmatpush.msra.mxu0 %v463
    %479 = vmatpush.msra.mxu0 %v462
    %480 = vmatpush.msra.mxu0 %v461
    %481 = vmatpush.msra.mxu0 %v460
    %482 = vmatpush.msra.mxu0 %v459
    %483 = vmatpush.msra.mxu0 %v458
    %484 = vmatpush.msra.mxu0 %v457
    %485 = vmatpush.msra.mxu0 %v456
    %486 = vmatpush.msra.mxu0 %v455
    %487 = vmatpush.msra.mxu0 %v454
    %488 = vmatmul.f32.gmra.mxu0 %v276
    %v489 = vpop.f32.mrf.mxu0
    %v490 = vadd.f32 %v471, %v489
    %491 = vdwg.mxu0
    %v492 = vsub.f32 %v277, %v490
    %v493 = vmul.f32 %v492, %v492
    %v494 = vsel %vm151, %v493, 0.0
    %495 = vadd.xlane.f32.xlu0 %v494
    %v496 = vpop.xlane.xlu0 %495
    %v498 = vlaneseq
    %v499 = vand.u32 %v498, 127
    %v500 = vperm.slane %v320, %v499
    %v503 = vperm.slane %v364, %v499
    %v506 = vperm.slane %v408, %v499
    %v509 = vperm.slane %v452, %v499
    %v512 = vperm.slane %v496, %v499
    %vm514 = vcmask 1040384
    %v515 = vsel %vm514, %v500, %v503
    %vm516 = vcmask 1041408
    %v517 = vsel %vm516, %v515, %v506
    %vm518 = vcmask 1042432
    %v519 = vsel %vm518, %v517, %v509
    %vm520 = vcmask 1043456
    %v521 = vsel %vm520, %v519, %v512
    %v522 = vrsqrt.pop %v521
    %v523 = vmul.f32 %v522, %v521
    %v524 = vmul.f32 %v523, %v522
    %v525 = vmul.f32 0.5, %v524
    %v526 = vsub.f32 1.5, %v525
    %v527 = vmul.f32 %v522, %v526
    %v528 = vmul.f32 %v521, %v527
    %vm529 = vcmp.eq.f32.partialorder %v521, inf
    %v530 = vsel %vm529, %v521, %v528
    %vm531 = vcmp.eq.f32.partialorder %v521, 0.0
    %v532 = vand.u32 %v521, 2147483648
    %v533 = vsel %vm531, %v532, %v530
    %vm534 = vcmask 61440
    %535 = vst.msk [vmem:[#allocation2] sm:$0x1f] %vm534, %v533
    // Predicated region
    $region34: #{tpu_custom_call.1} parent=1 // pred_check
      _
    $region35: #{tpu_custom_call.1} parent=1 // pred_check_branch
      %537 = sbr.rel (0) target = $region37
    $region36: #{tpu_custom_call.1} parent=1 // pred_region
      %539 = vsyncadd [#allocation3], 0
      %s541 = sshll.u32 [#allocation2], 4
      %s542 = int_to_ptr.vmem [resolvable:$true] %s541
      %s543 = sshll.u32 %s8, 4
      %s544 = int_to_ptr.hbm [resolvable:$true] %s543
      %546 = dma.vmem_to_hbm [thread:$0]  %s542, 128, %s544, [#allocation3]
    $region37: #{tpu_custom_call.1} parent=1 // pred_fallthru
      _
    // Predicated region
    $region38: #{tpu_custom_call.1} parent=1 // pred_check
      _
    $region39: #{tpu_custom_call.1} parent=1 // pred_check_branch
      %548 = sbr.rel (0) target = $region41
    $region40: #{tpu_custom_call.1} parent=1 // pred_region
      %550 = dma.done [#allocation3], 128
    $region41: #{tpu_custom_call.1} parent=1 // pred_fallthru
      _
    %551 = vsyncpa [#allocation3], 1

</llo_original>
